<compile_context>
chip_gen: v7x
topology: tpu7x:2x2x1
jax: 0.10.0
libtpu: 0.0.40
codegen_flags: <defaults>
</compile_context>

<pallas_src>
import jax
import jax.numpy as jnp
from jax.experimental import pallas as pl
from jax.experimental.pallas import tpu as pltpu

NUM_CLASSES = 4
N_MFCC = 13
IN_DIM = 2 * N_MFCC          # 26
H1 = 64
H2 = 32

SLAB = 128                   # packed parameter slab is (128, 128)
BIAS_COL = 127               # biases live in the last lane column of the slab
_R2 = H1                     # row offset of fc2 weights in the slab
_R3 = H1 + H2                # row offset of fc3 weights in the slab


def _round_up(n, m):
    return ((n + m - 1) // m) * m


def mlp_kernel(xt_ref, slab_ref, ot_ref):
    """One batch tile: xt_ref is (IN_DIM, TB), output tile is (NUM_CLASSES, TB)."""
    f32 = jnp.float32
    xt = xt_ref[...]                                          # (26, TB)

    # Static sub-views of the resident parameter slab (tiny per-step cost).
    w1 = slab_ref[0:H1, 0:IN_DIM]                             # (64, 26)
    w2 = slab_ref[_R2:_R2 + H2, 0:H1]                         # (32, 64)
    w3 = slab_ref[_R3:_R3 + NUM_CLASSES, 0:H2]                # (4, 32)
    b1 = slab_ref[0:H1, BIAS_COL:BIAS_COL + 1].astype(f32)    # (64, 1)
    b2 = slab_ref[_R2:_R2 + H2, BIAS_COL:BIAS_COL + 1].astype(f32)
    b3 = slab_ref[_R3:_R3 + NUM_CLASSES, BIAS_COL:BIAS_COL + 1].astype(f32)

    # fc1 + ReLU  (lane-dense (64, TB); bias/ReLU in f32, MXU accumulates in f32)
    h1 = jnp.dot(w1, xt, preferred_element_type=f32) + b1
    h1 = jnp.maximum(h1, 0.0)
    # fc2 + ReLU  (lane-dense (32, TB))
    h2 = jnp.dot(w2, h1.astype(w2.dtype), preferred_element_type=f32) + b2
    h2 = jnp.maximum(h2, 0.0)
    # fc3  (lane-dense (4, TB) output store)
    out = jnp.dot(w3, h2.astype(w3.dtype), preferred_element_type=f32) + b3
    ot_ref[...] = out.astype(ot_ref.dtype)


def pack_params(params, dtype=jnp.float32):
    """Pack w1/b1/w2/b2/w3/b3 into one (128, 128) slab (weights left, biases col 127)."""
    w1, b1, w2, b2, w3, b3 = params
    slab = jnp.zeros((SLAB, SLAB), dtype)
    slab = slab.at[0:H1, 0:IN_DIM].set(w1.astype(dtype))
    slab = slab.at[_R2:_R2 + H2, 0:H1].set(w2.astype(dtype))
    slab = slab.at[_R3:_R3 + NUM_CLASSES, 0:H2].set(w3.astype(dtype))
    slab = slab.at[0:H1, BIAS_COL].set(b1.astype(dtype))
    slab = slab.at[_R2:_R2 + H2, BIAS_COL].set(b2.astype(dtype))
    slab = slab.at[_R3:_R3 + NUM_CLASSES, BIAS_COL].set(b3.astype(dtype))
    return slab


def mlp_forward(x, params, *, compute_dtype=jnp.float32, tile_batch=1024):
    """x: (B, 26) float32. Returns (B, NUM_CLASSES) float32 logits."""
    B = x.shape[0]
    assert x.shape[1] == IN_DIM

    # Batch tile: multiple of 128 (lane axis), capped at tile_batch.
    tb = min(_round_up(tile_batch, 128), _round_up(max(B, 1), 128))
    b_pad = _round_up(B, tb)
    grid = (b_pad // tb,)

    slab = pack_params(params, compute_dtype)
    # Wrapper-side transpose + pad + cast (single fused XLA op): batch on lanes.
    xt = jnp.pad(x.astype(compute_dtype).T, ((0, 0), (0, b_pad - B)))

    itemsize = jnp.dtype(compute_dtype).itemsize
    cost = pl.CostEstimate(
        flops=2 * b_pad * (IN_DIM * H1 + H1 * H2 + H2 * NUM_CLASSES),
        transcendentals=0,
        bytes_accessed=IN_DIM * b_pad * itemsize
        + SLAB * SLAB * itemsize
        + NUM_CLASSES * b_pad * 4,
    )

    out_t = pl.pallas_call(
        mlp_kernel,
        out_shape=jax.ShapeDtypeStruct((NUM_CLASSES, b_pad), jnp.float32),
        grid_spec=pltpu.PrefetchScalarGridSpec(
            num_scalar_prefetch=0,
            grid=grid,
            in_specs=[
                # x tiles stream over the batch grid (double-buffered DMA).
                pl.BlockSpec((IN_DIM, tb), lambda i: (0, i)),
                # parameter slab: constant block index -> VMEM-resident, one DMA.
                pl.BlockSpec((SLAB, SLAB), lambda i: (0, 0)),
            ],
            out_specs=pl.BlockSpec((NUM_CLASSES, tb), lambda i: (0, i)),
        ),
        compiler_params=pltpu.CompilerParams(
            dimension_semantics=("parallel",),
        ),
        cost_estimate=cost,
    )(xt, slab)

    return out_t[:, :B].T


def init_params(key):
    """PyTorch nn.Linear layout/init: w (out, in), b (out,), U[-1/sqrt(fan_in), +1/sqrt(fan_in)]."""
    ks = jax.random.split(key, 6)

    def linear(kw, kb, fan_in, fan_out):
        bound = 1.0 / jnp.sqrt(fan_in)
        w = jax.random.uniform(kw, (fan_out, fan_in), jnp.float32, -bound, bound)
        b = jax.random.uniform(kb, (fan_out,), jnp.float32, -bound, bound)
        return w, b

    w1, b1 = linear(ks[0], ks[1], IN_DIM, H1)
    w2, b2 = linear(ks[2], ks[3], H1, H2)
    w3, b3 = linear(ks[4], ks[5], H2, NUM_CLASSES)
    return (w1, b1, w2, b2, w3, b3)


def mlp_reference(x, params, compute_dtype=jnp.float32):
    """Pure-JAX reference. For compute_dtype != f32 it mirrors the kernel's
    quantization points (inputs/weights/biases cast to compute_dtype before
    each dot, bias-add/ReLU in f32)."""
    w1, b1, w2, b2, w3, b3 = params
    f32 = jnp.float32
    q = lambda a: a.astype(compute_dtype).astype(f32)
    h1 = jnp.maximum(q(x) @ q(w1).T + q(b1), 0.0)
    h2 = jnp.maximum(q(h1) @ q(w2).T + q(b2), 0.0)
    return q(h2) @ q(w3).T + q(b3)


if __name__ == "__main__":
    key = jax.random.PRNGKey(0)
    k_params, k_x = jax.random.split(key)
    params = init_params(k_params)

    batch = 8
    x = jax.random.normal(k_x, (batch, IN_DIM), dtype=jnp.float32)

    # f32 path (default): should match the reference tightly.
    out = jax.block_until_ready(mlp_forward(x, params))
    ref = mlp_reference(x, params)
    assert out.shape == (batch, NUM_CLASSES)
    assert jnp.allclose(out, ref, atol=1e-4, rtol=1e-4)

    # bf16 input/weight path (halves streamed HBM bytes; bias/ReLU stay f32).
    out_bf = jax.block_until_ready(mlp_forward(x, params, compute_dtype=jnp.bfloat16))
    ref_bf = mlp_reference(x, params, compute_dtype=jnp.bfloat16)
    assert jnp.allclose(out_bf, ref_bf, atol=2e-2, rtol=2e-2)

    # Larger, non-tile-multiple batch to exercise the tiled grid + tail padding.
    x2 = jax.random.normal(jax.random.PRNGKey(1), (300, IN_DIM), dtype=jnp.float32)
    out2 = jax.block_until_ready(mlp_forward(x2, params, tile_batch=256))  # grid=(2,)
    ref2 = mlp_reference(x2, params)
    assert out2.shape == (300, NUM_CLASSES)
    assert jnp.allclose(out2, ref2, atol=1e-4, rtol=1e-4)

    print("KERNEL_OK")
</pallas_src>

<mosaic_0001>
module attributes {stable_mosaic.version = 11 : i64} {
  func.func @mlp_kernel(%arg0: i32, %arg1: memref<26x128xf32, #tpu.memory_space<vmem>>, %arg2: memref<128x128xf32, #tpu.memory_space<vmem>>, %arg3: memref<4x128xf32, #tpu.memory_space<vmem>>) attributes {dimension_semantics = [#tpu.dimension_semantics<parallel>], iteration_bounds = array<i64: 1>, scalar_prefetch = 0 : i64, scratch_operands = 0 : i64, tpu.core_type = #tpu.core_type<tc>, window_params = [{transform_indices = @transform_0, window_bounds = array<i64: 26, 128>}, {pipeline_mode = #tpu.pipeline_mode<synchronous>, transform_indices = @transform_1, window_bounds = array<i64: 128, 128>}, {transform_indices = @transform_2, window_bounds = array<i64: 4, 128>}]} {
    %c0 = arith.constant 0 : index
    %c0_0 = arith.constant 0 : index
    %0 = vector.load %arg1[%c0, %c0_0] : memref<26x128xf32, #tpu.memory_space<vmem>>, vector<26x128xf32>
    %c0_1 = arith.constant 0 : index
    %c0_2 = arith.constant 0 : index
    %1 = vector.load %arg2[%c0_1, %c0_2] : memref<128x128xf32, #tpu.memory_space<vmem>>, vector<64x26xf32>
    %c64 = arith.constant 64 : index
    %c0_3 = arith.constant 0 : index
    %2 = vector.load %arg2[%c64, %c0_3] : memref<128x128xf32, #tpu.memory_space<vmem>>, vector<32x64xf32>
    %c96 = arith.constant 96 : index
    %c0_4 = arith.constant 0 : index
    %3 = vector.load %arg2[%c96, %c0_4] : memref<128x128xf32, #tpu.memory_space<vmem>>, vector<4x32xf32>
    %c0_5 = arith.constant 0 : index
    %c127 = arith.constant 127 : index
    %4 = vector.load %arg2[%c0_5, %c127] : memref<128x128xf32, #tpu.memory_space<vmem>>, vector<64x1xf32>
    %c64_6 = arith.constant 64 : index
    %c127_7 = arith.constant 127 : index
    %5 = vector.load %arg2[%c64_6, %c127_7] : memref<128x128xf32, #tpu.memory_space<vmem>>, vector<32x1xf32>
    %c96_8 = arith.constant 96 : index
    %c127_9 = arith.constant 127 : index
    %6 = vector.load %arg2[%c96_8, %c127_9] : memref<128x128xf32, #tpu.memory_space<vmem>>, vector<4x1xf32>
    %cst = arith.constant dense<0.000000e+00> : vector<64x128xf32>
    %7 = tpu.matmul %1, %0, %cst {dimension_numbers = #tpu.dot_dimension_numbers<[1], [0], [0], [1], [0, 0, 1, 1], [], []>} : vector<64x26xf32>, vector<26x128xf32>, vector<64x128xf32> -> vector<64x128xf32>
    %8 = vector.broadcast %4 : vector<64x1xf32> to vector<64x128xf32>
    %9 = arith.addf %7, %8 : vector<64x128xf32>
    %cst_10 = arith.constant 0.000000e+00 : f32
    %10 = vector.broadcast %cst_10 : f32 to vector<64x128xf32>
    %11 = arith.maximumf %9, %10 : vector<64x128xf32>
    %cst_11 = arith.constant dense<0.000000e+00> : vector<32x128xf32>
    %12 = tpu.matmul %2, %11, %cst_11 {dimension_numbers = #tpu.dot_dimension_numbers<[1], [0], [0], [1], [0, 0, 1, 1], [], []>} : vector<32x64xf32>, vector<64x128xf32>, vector<32x128xf32> -> vector<32x128xf32>
    %13 = vector.broadcast %5 : vector<32x1xf32> to vector<32x128xf32>
    %14 = arith.addf %12, %13 : vector<32x128xf32>
    %cst_12 = arith.constant 0.000000e+00 : f32
    %15 = vector.broadcast %cst_12 : f32 to vector<32x128xf32>
    %16 = arith.maximumf %14, %15 : vector<32x128xf32>
    %cst_13 = arith.constant dense<0.000000e+00> : vector<4x128xf32>
    %17 = tpu.matmul %3, %16, %cst_13 {dimension_numbers = #tpu.dot_dimension_numbers<[1], [0], [0], [1], [0, 0, 1, 1], [], []>} : vector<4x32xf32>, vector<32x128xf32>, vector<4x128xf32> -> vector<4x128xf32>
    %18 = vector.broadcast %6 : vector<4x1xf32> to vector<4x128xf32>
    %19 = arith.addf %17, %18 : vector<4x128xf32>
    %c0_14 = arith.constant 0 : index
    %c0_15 = arith.constant 0 : index
    %20 = vector.load %arg3[%c0_14, %c0_15] : memref<4x128xf32, #tpu.memory_space<vmem>>, vector<4x128xf32>
    tpu.vector_store %arg3[%c0_14, %c0_15], %19 {strides = array<i32>} : memref<4x128xf32, #tpu.memory_space<vmem>>, vector<4x128xf32>,
    return
  }
  func.func @transform_0(%arg0: i32) -> (i32, i32) {
    %c0_i32 = arith.constant 0 : i32
    %c0_i32_0 = arith.constant 0 : i32
    return %c0_i32, %arg0 : i32, i32
  }
  func.func @transform_1(%arg0: i32) -> (i32, i32) {
    %c0_i32 = arith.constant 0 : i32
    %c0_i32_0 = arith.constant 0 : i32
    %c0_i32_1 = arith.constant 0 : i32
    return %c0_i32, %c0_i32_0 : i32, i32
  }
  func.func @transform_2(%arg0: i32) -> (i32, i32) {
    %c0_i32 = arith.constant 0 : i32
    %c0_i32_0 = arith.constant 0 : i32
    return %c0_i32, %arg0 : i32, i32
  }
}

</mosaic_0001>

<llo_original>
// kernel: tpu_custom_call.1
$region0: #{tpu_custom_call.1}
  #allocation0 [shape = 'u32[]', space=smem, size = 0x4, offset = 0x4, fixed_abs, tag = 'smem constant byte address 0x4 - core index']
  #allocation1 [shape = 'u32[144,128]{1,0:T(1,128)}', space=vmem, size = 0x12000, scoped, tag = 'internal scratch']
  %s0 = inlined_call_operand.hbm [shape: f32[26,128], index: 0, kind: input, shape index: {}]
  %s1 = inlined_call_operand.hbm [shape: f32[128,128], index: 1, kind: input, shape index: {}]
  %s2 = inlined_call_operand.hbm [shape: f32[4,128], index: 2, kind: output, shape index: {}]
  %s3 = sld [smem:[#allocation0]]
  $region26: #{tpu_custom_call.1} parent=0
    _
  %s5 = ssub.s32 1, %s3
  %s6 = scalar_select 0, %s5, %s3
  $region1: #{tpu_custom_call.1} parent=0
    #allocation2 [shape = 'u8[16384]{0}', space=vmem, size = 0x4000, scoped, tag = 'input window, operand 0, single buffered']
    #allocation3 [shape = 's32[1]{0}', space=sflag, size = 0x4, scoped, tag = 'scoped memory for tpu_custom_call.1']
    #allocation4 [shape = 's32[1]{0}', space=sflag, size = 0x4, scoped, tag = 'scoped memory for tpu_custom_call.1']
    #allocation5 [shape = 'u8[65536]{0}', space=vmem, size = 0x10000, scoped, tag = 'input window, operand 1, single buffered']
    #allocation6 [shape = 's32[1]{0}', space=sflag, size = 0x4, scoped, tag = 'scoped memory for tpu_custom_call.1']
    #allocation7 [shape = 'u8[2048]{0}', space=vmem, size = 0x800, scoped, tag = 'output window, operand 0, single buffered']
    %7 = vsyncpa [#allocation3], 0
    %8 = vsyncpa [#allocation6], 0
    %9 = vsyncpa [#allocation4], 0
    // Predicated region
    $region2: #{tpu_custom_call.1} parent=1 // pred_check
      _
    $region3: #{tpu_custom_call.1} parent=1 // pred_check_branch
      %11 = sbr.rel (0) target = $region5
    $region4: #{tpu_custom_call.1} parent=1 // pred_region
      %s13 = ssub.s32 512, 512
      %14 = vsyncadd [#allocation3], %s13
      %s15 = sshll.u32 [#allocation2], 4
      %s16 = int_to_ptr.vmem [resolvable:$true] %s15
      %21 = dma.hbm_to_vmem [thread:$0]  %s0, 512, %s16, [#allocation3], 128, 128, 8
    $region5: #{tpu_custom_call.1} parent=1 // pred_fallthru
      _
    // Predicated region
    $region6: #{tpu_custom_call.1} parent=1 // pred_check
      _
    $region7: #{tpu_custom_call.1} parent=1 // pred_check_branch
      %23 = sbr.rel (0) target = $region9
    $region8: #{tpu_custom_call.1} parent=1 // pred_region
      %s25 = ssub.s32 2048, 2048
      %26 = vsyncadd [#allocation6], %s25
      %s27 = sshll.u32 [#allocation5], 4
      %s28 = int_to_ptr.vmem [resolvable:$true] %s27
      %33 = dma.hbm_to_vmem [thread:$0]  %s1, 2048, %s28, [#allocation6], 128, 128, 8
    $region9: #{tpu_custom_call.1} parent=1 // pred_fallthru
      _
    // Predicated region
    $region10: #{tpu_custom_call.1} parent=1 // pred_check
      _
    $region11: #{tpu_custom_call.1} parent=1 // pred_check_branch
      %35 = sbr.rel (0) target = $region13
    $region12: #{tpu_custom_call.1} parent=1 // pred_region
      %36 = dma.done [#allocation3], 512
    $region13: #{tpu_custom_call.1} parent=1 // pred_fallthru
      _
    // Predicated region
    $region14: #{tpu_custom_call.1} parent=1 // pred_check
      _
    $region15: #{tpu_custom_call.1} parent=1 // pred_check_branch
      %38 = sbr.rel (0) target = $region17
    $region16: #{tpu_custom_call.1} parent=1 // pred_region
      %39 = dma.done [#allocation6], 2048
    $region17: #{tpu_custom_call.1} parent=1 // pred_fallthru
      _
    %v40 = vld [vmem:[#allocation2] sm:$0xff]
    %v41 = vld [vmem:[#allocation2 + $0x8] sm:$0xff]
    %v42 = vld [vmem:[#allocation2 + $0x10] sm:$0xff]
    %v43 = vld [vmem:[#allocation2 + $0x18] sm:$0x3]
    %v44 = vld [vmem:[#allocation5] sm:$0xff]
    %v45 = vld [vmem:[#allocation5 + $0x8] sm:$0xff]
    %v46 = vld [vmem:[#allocation5 + $0x10] sm:$0xff]
    %v47 = vld [vmem:[#allocation5 + $0x18] sm:$0xff]
    %v48 = vld [vmem:[#allocation5 + $0x20] sm:$0xff]
    %v49 = vld [vmem:[#allocation5 + $0x28] sm:$0xff]
    %v50 = vld [vmem:[#allocation5 + $0x30] sm:$0xff]
    %v51 = vld [vmem:[#allocation5 + $0x38] sm:$0xff]
    %v52 = vld [vmem:[#allocation5 + $0x40] sm:$0xff]
    %v53 = vld [vmem:[#allocation5 + $0x48] sm:$0xff]
    %v54 = vld [vmem:[#allocation5 + $0x50] sm:$0xff]
    %v55 = vld [vmem:[#allocation5 + $0x58] sm:$0xff]
    %v56 = vld [vmem:[#allocation5 + $0x60] sm:$0xf]
    %58 = vset.pattern.permute.xlu0 127
    %59 = vperm.xlu0 %58, %v44
    %v60 = vpop.permute.xlu0 %59
    %63 = vset.pattern.permute.xlu0 127
    %64 = vperm.xlu0 %63, %v45
    %v65 = vpop.permute.xlu0 %64
    %68 = vset.pattern.permute.xlu0 127
    %69 = vperm.xlu0 %68, %v46
    %v70 = vpop.permute.xlu0 %69
    %73 = vset.pattern.permute.xlu0 127
    %74 = vperm.xlu0 %73, %v47
    %v75 = vpop.permute.xlu0 %74
    %78 = vset.pattern.permute.xlu0 127
    %79 = vperm.xlu0 %78, %v48
    %v80 = vpop.permute.xlu0 %79
    %83 = vset.pattern.permute.xlu0 127
    %84 = vperm.xlu0 %83, %v49
    %v85 = vpop.permute.xlu0 %84
    %88 = vset.pattern.permute.xlu0 127
    %89 = vperm.xlu0 %88, %v50
    %v90 = vpop.permute.xlu0 %89
    %93 = vset.pattern.permute.xlu0 127
    %94 = vperm.xlu0 %93, %v51
    %v95 = vpop.permute.xlu0 %94
    %vm97 = vcmask 211968
    %v98 = vsel %vm97, %v44, 0
    %v100 = vsel %vm97, %v45, 0
    %v102 = vsel %vm97, %v46, 0
    %v104 = vsel %vm97, %v47, 0
    %v106 = vsel %vm97, %v48, 0
    %v108 = vsel %vm97, %v49, 0
    %v110 = vsel %vm97, %v50, 0
    %v112 = vsel %vm97, %v51, 0
    %vm114 = vcmask 1041408
    %v116 = vsel %vm114, %v43, 0
    %118 = vmatprep.subr.mxu0 0.0
    %119 = vmatpush1.msra.mxu0 %v40
    %120 = vmatprep.subr.mxu0 0.0
    %121 = vmatpush1.msra.mxu0 %v41
    %122 = vmatprep.subr.mxu0 0.0
    %123 = vmatpush1.msra.mxu0 %v42
    %124 = vmatprep.subr.mxu0 0.0
    %125 = vmatpush1.msra.mxu0 %v116
    %126 = vmatprep.subr.mxu0 0.0
    %127 = vmatpush1.msra.mxu0 0.0
    %128 = vmatprep.subr.mxu0 0.0
    %129 = vmatpush1.msra.mxu0 0.0
    %130 = vmatprep.subr.mxu0 0.0
    %131 = vmatpush1.msra.mxu0 0.0
    %132 = vmatprep.subr.mxu0 0.0
    %133 = vmatpush1.msra.mxu0 0.0
    %134 = vmatprep.subr.mxu0 0.0
    %135 = vmatpush1.msra.mxu0 0.0
    %136 = vmatprep.subr.mxu0 0.0
    %137 = vmatpush1.msra.mxu0 0.0
    %138 = vmatprep.subr.mxu0 0.0
    %139 = vmatpush1.msra.mxu0 0.0
    %140 = vmatprep.subr.mxu0 0.0
    %141 = vmatpush1.msra.mxu0 0.0
    %142 = vmatprep.subr.mxu0 0.0
    %143 = vmatpush1.msra.mxu0 0.0
    %144 = vmatprep.subr.mxu0 0.0
    %145 = vmatpush1.msra.mxu0 0.0
    %146 = vmatprep.subr.mxu0 0.0
    %147 = vmatpush1.msra.mxu0 0.0
    %148 = vmatprep.subr.mxu0 0.0
    %149 = vmatpush1.msra.mxu0 0.0
    %150 = vmatprep.subr.mxu0 0.0
    %151 = vmatpush1.msra.mxu0 0.0
    %152 = vmatprep.subr.mxu0 0.0
    %153 = vmatpush1.msra.mxu0 0.0
    %154 = vmatprep.subr.mxu0 0.0
    %155 = vmatpush1.msra.mxu0 0.0
    %156 = vmatprep.subr.mxu0 0.0
    %157 = vmatpush1.msra.mxu0 0.0
    %158 = vmatprep.subr.mxu0 0.0
    %159 = vmatpush1.msra.mxu0 0.0
    %160 = vmatprep.subr.mxu0 0.0
    %161 = vmatpush1.msra.mxu0 0.0
    %162 = vmatprep.subr.mxu0 0.0
    %163 = vmatpush1.msra.mxu0 0.0
    %164 = vmatprep.subr.mxu0 0.0
    %165 = vmatpush1.msra.mxu0 0.0
    %166 = vmatprep.subr.mxu0 0.0
    %167 = vmatpush1.msra.mxu0 0.0
    %168 = vmatprep.subr.mxu0 0.0
    %169 = vmatpush1.msra.mxu0 0.0
    %170 = vmatprep.subr.mxu0 0.0
    %171 = vmatpush1.msra.mxu0 0.0
    %172 = vmatprep.subr.mxu0 0.0
    %173 = vmatpush1.msra.mxu0 0.0
    %174 = vmatprep.subr.mxu0 0.0
    %175 = vmatpush1.msra.mxu0 0.0
    %176 = vmatprep.subr.mxu0 0.0
    %177 = vmatpush1.msra.mxu0 0.0
    %178 = vmatprep.subr.mxu0 0.0
    %179 = vmatpush1.msra.mxu0 0.0
    %180 = vmatprep.subr.mxu0 0.0
    %181 = vmatpush1.msra.mxu0 0.0
    %182 = vmatprep.mubr.f32.mxu0 0.0
    %183 = vmatmul.mubr.f32.gmra.mrb[0].mxu0 %v98
    %v184 = vpop.f32.mrb[0].mxu0
    %v185 = vadd.f32 %v60, %v184
    %v186 = vpop.f32.mrb[0].mxu0
    %187 = vmatprep.mubr.f32.mxu0 0.0
    %188 = vmatmul.mubr.f32.gmra.mrb[0].mxu0 %v100
    %v189 = vpop.f32.mrb[0].mxu0
    %v190 = vadd.f32 %v65, %v189
    %v191 = vpop.f32.mrb[0].mxu0
    %192 = vmatprep.mubr.f32.mxu0 0.0
    %193 = vmatmul.mubr.f32.gmra.mrb[0].mxu0 %v102
    %v194 = vpop.f32.mrb[0].mxu0
    %v195 = vadd.f32 %v70, %v194
    %v196 = vpop.f32.mrb[0].mxu0
    %197 = vmatprep.mubr.f32.mxu0 0.0
    %198 = vmatmul.mubr.f32.gmra.mrb[0].mxu0 %v104
    %v199 = vpop.f32.mrb[0].mxu0
    %v200 = vadd.f32 %v75, %v199
    %v201 = vpop.f32.mrb[0].mxu0
    %202 = vmatprep.mubr.f32.mxu0 0.0
    %203 = vmatmul.mubr.f32.gmra.mrb[0].mxu0 %v106
    %v204 = vpop.f32.mrb[0].mxu0
    %v205 = vadd.f32 %v80, %v204
    %v206 = vpop.f32.mrb[0].mxu0
    %207 = vmatprep.mubr.f32.mxu0 0.0
    %208 = vmatmul.mubr.f32.gmra.mrb[0].mxu0 %v108
    %v209 = vpop.f32.mrb[0].mxu0
    %v210 = vadd.f32 %v85, %v209
    %v211 = vpop.f32.mrb[0].mxu0
    %212 = vmatprep.mubr.f32.mxu0 0.0
    %213 = vmatmul.mubr.f32.gmra.mrb[0].mxu0 %v110
    %v214 = vpop.f32.mrb[0].mxu0
    %v215 = vadd.f32 %v90, %v214
    %v216 = vpop.f32.mrb[0].mxu0
    %217 = vmatprep.mubr.f32.mxu0 0.0
    %218 = vmatmul.mubr.f32.gmra.mrb[0].mxu0 %v112
    %v219 = vpop.f32.mrb[0].mxu0
    %v220 = vadd.f32 %v95, %v219
    %v221 = vpop.f32.mrb[0].mxu0
    %222 = vdwg.mxu0
    %v223 = vmax.f32 %v185, 0.0
    %v224 = vmax.f32 %v190, 0.0
    %v225 = vmax.f32 %v195, 0.0
    %v226 = vmax.f32 %v200, 0.0
    %v227 = vmax.f32 %v205, 0.0
    %v228 = vmax.f32 %v210, 0.0
    %v229 = vmax.f32 %v215, 0.0
    %v230 = vmax.f32 %v220, 0.0
    %232 = vset.pattern.permute.xlu0 127
    %233 = vperm.xlu0 %232, %v52
    %v234 = vpop.permute.xlu0 %233
    %237 = vset.pattern.permute.xlu0 127
    %238 = vperm.xlu0 %237, %v53
    %v239 = vpop.permute.xlu0 %238
    %242 = vset.pattern.permute.xlu0 127
    %243 = vperm.xlu0 %242, %v54
    %v244 = vpop.permute.xlu0 %243
    %247 = vset.pattern.permute.xlu0 127
    %248 = vperm.xlu0 %247, %v55
    %v249 = vpop.permute.xlu0 %248
    %vm251 = vcmask 523264
    %v252 = vsel %vm251, %v52, 0
    %v254 = vsel %vm251, %v53, 0
    %v256 = vsel %vm251, %v54, 0
    %v258 = vsel %vm251, %v55, 0
    %260 = vmatprep.subr.mxu0 0.0
    %261 = vmatpush1.msra.mxu0 %v223
    %262 = vmatprep.subr.mxu0 0.0
    %263 = vmatpush1.msra.mxu0 %v224
    %264 = vmatprep.subr.mxu0 0.0
    %265 = vmatpush1.msra.mxu0 %v225
    %266 = vmatprep.subr.mxu0 0.0
    %267 = vmatpush1.msra.mxu0 %v226
    %268 = vmatprep.subr.mxu0 0.0
    %269 = vmatpush1.msra.mxu0 %v227
    %270 = vmatprep.subr.mxu0 0.0
    %271 = vmatpush1.msra.mxu0 %v228
    %272 = vmatprep.subr.mxu0 0.0
    %273 = vmatpush1.msra.mxu0 %v229
    %274 = vmatprep.subr.mxu0 0.0
    %275 = vmatpush1.msra.mxu0 %v230
    %276 = vmatprep.subr.mxu0 0.0
    %277 = vmatpush1.msra.mxu0 0.0
    %278 = vmatprep.subr.mxu0 0.0
    %279 = vmatpush1.msra.mxu0 0.0
    %280 = vmatprep.subr.mxu0 0.0
    %281 = vmatpush1.msra.mxu0 0.0
    %282 = vmatprep.subr.mxu0 0.0
    %283 = vmatpush1.msra.mxu0 0.0
    %284 = vmatprep.subr.mxu0 0.0
    %285 = vmatpush1.msra.mxu0 0.0
    %286 = vmatprep.subr.mxu0 0.0
    %287 = vmatpush1.msra.mxu0 0.0
    %288 = vmatprep.subr.mxu0 0.0
    %289 = vmatpush1.msra.mxu0 0.0
    %290 = vmatprep.subr.mxu0 0.0
    %291 = vmatpush1.msra.mxu0 0.0
    %292 = vmatprep.subr.mxu0 0.0
    %293 = vmatpush1.msra.mxu0 0.0
    %294 = vmatprep.subr.mxu0 0.0
    %295 = vmatpush1.msra.mxu0 0.0
    %296 = vmatprep.subr.mxu0 0.0
    %297 = vmatpush1.msra.mxu0 0.0
    %298 = vmatprep.subr.mxu0 0.0
    %299 = vmatpush1.msra.mxu0 0.0
    %300 = vmatprep.subr.mxu0 0.0
    %301 = vmatpush1.msra.mxu0 0.0
    %302 = vmatprep.subr.mxu0 0.0
    %303 = vmatpush1.msra.mxu0 0.0
    %304 = vmatprep.subr.mxu0 0.0
    %305 = vmatpush1.msra.mxu0 0.0
    %306 = vmatprep.subr.mxu0 0.0
    %307 = vmatpush1.msra.mxu0 0.0
    %308 = vmatprep.subr.mxu0 0.0
    %309 = vmatpush1.msra.mxu0 0.0
    %310 = vmatprep.subr.mxu0 0.0
    %311 = vmatpush1.msra.mxu0 0.0
    %312 = vmatprep.subr.mxu0 0.0
    %313 = vmatpush1.msra.mxu0 0.0
    %314 = vmatprep.subr.mxu0 0.0
    %315 = vmatpush1.msra.mxu0 0.0
    %316 = vmatprep.subr.mxu0 0.0
    %317 = vmatpush1.msra.mxu0 0.0
    %318 = vmatprep.subr.mxu0 0.0
    %319 = vmatpush1.msra.mxu0 0.0
    %320 = vmatprep.subr.mxu0 0.0
    %321 = vmatpush1.msra.mxu0 0.0
    %322 = vmatprep.subr.mxu0 0.0
    %323 = vmatpush1.msra.mxu0 0.0
    %324 = vmatprep.mubr.f32.mxu0 0.0
    %325 = vmatmul.mubr.f32.gmra.mrb[0].mxu0 %v252
    %v326 = vpop.f32.mrb[0].mxu0
    %v327 = vadd.f32 %v234, %v326
    %v328 = vpop.f32.mrb[0].mxu0
    %329 = vmatprep.mubr.f32.mxu0 0.0
    %330 = vmatmul.mubr.f32.gmra.mrb[0].mxu0 %v254
    %v331 = vpop.f32.mrb[0].mxu0
    %v332 = vadd.f32 %v239, %v331
    %v333 = vpop.f32.mrb[0].mxu0
    %334 = vmatprep.mubr.f32.mxu0 0.0
    %335 = vmatmul.mubr.f32.gmra.mrb[0].mxu0 %v256
    %v336 = vpop.f32.mrb[0].mxu0
    %v337 = vadd.f32 %v244, %v336
    %v338 = vpop.f32.mrb[0].mxu0
    %339 = vmatprep.mubr.f32.mxu0 0.0
    %340 = vmatmul.mubr.f32.gmra.mrb[0].mxu0 %v258
    %v341 = vpop.f32.mrb[0].mxu0
    %v342 = vadd.f32 %v249, %v341
    %v343 = vpop.f32.mrb[0].mxu0
    %344 = vdwg.mxu0
    %v345 = vmax.f32 %v327, 0.0
    %v346 = vmax.f32 %v332, 0.0
    %v347 = vmax.f32 %v337, 0.0
    %v348 = vmax.f32 %v342, 0.0
    %350 = vset.pattern.permute.xlu0 127
    %351 = vperm.xlu0 %350, %v56
    %v352 = vpop.permute.xlu0 %351
    %vm354 = vcmask 261120
    %v355 = vsel %vm354, %v56, 0
    %357 = vmatprep.subr.mxu0 0.0
    %358 = vmatpush1.msra.mxu0 %v345
    %359 = vmatprep.subr.mxu0 0.0
    %360 = vmatpush1.msra.mxu0 %v346
    %361 = vmatprep.subr.mxu0 0.0
    %362 = vmatpush1.msra.mxu0 %v347
    %363 = vmatprep.subr.mxu0 0.0
    %364 = vmatpush1.msra.mxu0 %v348
    %365 = vmatprep.subr.mxu0 0.0
    %366 = vmatpush1.msra.mxu0 0.0
    %367 = vmatprep.subr.mxu0 0.0
    %368 = vmatpush1.msra.mxu0 0.0
    %369 = vmatprep.subr.mxu0 0.0
    %370 = vmatpush1.msra.mxu0 0.0
    %371 = vmatprep.subr.mxu0 0.0
    %372 = vmatpush1.msra.mxu0 0.0
    %373 = vmatprep.subr.mxu0 0.0
    %374 = vmatpush1.msra.mxu0 0.0
    %375 = vmatprep.subr.mxu0 0.0
    %376 = vmatpush1.msra.mxu0 0.0
    %377 = vmatprep.subr.mxu0 0.0
    %378 = vmatpush1.msra.mxu0 0.0
    %379 = vmatprep.subr.mxu0 0.0
    %380 = vmatpush1.msra.mxu0 0.0
    %381 = vmatprep.subr.mxu0 0.0
    %382 = vmatpush1.msra.mxu0 0.0
    %383 = vmatprep.subr.mxu0 0.0
    %384 = vmatpush1.msra.mxu0 0.0
    %385 = vmatprep.subr.mxu0 0.0
    %386 = vmatpush1.msra.mxu0 0.0
    %387 = vmatprep.subr.mxu0 0.0
    %388 = vmatpush1.msra.mxu0 0.0
    %389 = vmatprep.subr.mxu0 0.0
    %390 = vmatpush1.msra.mxu0 0.0
    %391 = vmatprep.subr.mxu0 0.0
    %392 = vmatpush1.msra.mxu0 0.0
    %393 = vmatprep.subr.mxu0 0.0
    %394 = vmatpush1.msra.mxu0 0.0
    %395 = vmatprep.subr.mxu0 0.0
    %396 = vmatpush1.msra.mxu0 0.0
    %397 = vmatprep.subr.mxu0 0.0
    %398 = vmatpush1.msra.mxu0 0.0
    %399 = vmatprep.subr.mxu0 0.0
    %400 = vmatpush1.msra.mxu0 0.0
    %401 = vmatprep.subr.mxu0 0.0
    %402 = vmatpush1.msra.mxu0 0.0
    %403 = vmatprep.subr.mxu0 0.0
    %404 = vmatpush1.msra.mxu0 0.0
    %405 = vmatprep.subr.mxu0 0.0
    %406 = vmatpush1.msra.mxu0 0.0
    %407 = vmatprep.subr.mxu0 0.0
    %408 = vmatpush1.msra.mxu0 0.0
    %409 = vmatprep.subr.mxu0 0.0
    %410 = vmatpush1.msra.mxu0 0.0
    %411 = vmatprep.subr.mxu0 0.0
    %412 = vmatpush1.msra.mxu0 0.0
    %413 = vmatprep.subr.mxu0 0.0
    %414 = vmatpush1.msra.mxu0 0.0
    %415 = vmatprep.subr.mxu0 0.0
    %416 = vmatpush1.msra.mxu0 0.0
    %417 = vmatprep.subr.mxu0 0.0
    %418 = vmatpush1.msra.mxu0 0.0
    %419 = vmatprep.subr.mxu0 0.0
    %420 = vmatpush1.msra.mxu0 0.0
    %421 = vmatprep.mubr.f32.mxu0 0.0
    %422 = vmatmul.mubr.f32.gmra.mrb[0].mxu0 %v355
    %v423 = vpop.f32.mrb[0].mxu0
    %v424 = vadd.f32 %v352, %v423
    %v425 = vpop.f32.mrb[0].mxu0
    %426 = vdwg.mxu0
    %427 = vst [vmem:[#allocation7] sm:$0xf] %v424
    // Predicated region
    $region18: #{tpu_custom_call.1} parent=1 // pred_check
      _
    $region19: #{tpu_custom_call.1} parent=1 // pred_check_branch
      %429 = sbr.rel (0) target = $region21
    $region20: #{tpu_custom_call.1} parent=1 // pred_region
      %s431 = ssub.s32 64, 64
      %432 = vsyncadd [#allocation4], %s431
      %s434 = sshll.u32 [#allocation7], 4
      %s435 = int_to_ptr.vmem [resolvable:$true] %s434
      %437 = dma.vmem_to_hbm [thread:$0]  %s435, 64, %s2, [#allocation4]
    $region21: #{tpu_custom_call.1} parent=1 // pred_fallthru
      _
    // Predicated region
    $region22: #{tpu_custom_call.1} parent=1 // pred_check
      _
    $region23: #{tpu_custom_call.1} parent=1 // pred_check_branch
      %439 = sbr.rel (0) target = $region25
    $region24: #{tpu_custom_call.1} parent=1 // pred_region
      %440 = dma.done [#allocation4], 64
    $region25: #{tpu_custom_call.1} parent=1 // pred_fallthru
      _
    %441 = vsyncpa [#allocation3], 1
    %442 = vsyncpa [#allocation6], 1
    %443 = vsyncpa [#allocation4], 1

</llo_original>
